<compile_context>
chip_gen: v7x
topology: tpu7x:2x2x1
jax: 0.10.0
libtpu: 0.0.40
codegen_flags: <defaults>
</compile_context>

<pallas_src>
import jax
import jax.numpy as jnp
from jax.experimental import pallas as pl
from jax.experimental.pallas import tpu as pltpu

_LANE = 128
_SMALL_INPUT_BYTES = 1 << 20  # below ~1 MiB a standalone kernel launch is a loss


def _block_bytes_and_vmem_limit():
    """Generation-aware (block_bytes, vmem_limit_bytes).

    v5e/v6e have 128 MiB VMEM -> 8 MiB blocks (32 MiB resident across the 4
    double-buffered in/out blocks). v7x has only 64 MiB VMEM per TC -> keep
    4 MiB blocks (16 MiB resident) to leave headroom. Unknown -> conservative.
    """
    try:
        info = pltpu.get_tpu_info()
        vmem = getattr(info, "vmem_capacity_bytes", None)
        if vmem is not None and vmem > (64 << 20):
            return 8 << 20, 64 << 20
    except Exception:
        pass
    return 4 << 20, 32 << 20


_BLOCK_BYTES, _VMEM_LIMIT_BYTES = _block_bytes_and_vmem_limit()


def _scale_kernel(w_ref, b_ref, x_ref, o_ref):
    # w_ref / b_ref: f32 scalars in SMEM; x_ref / o_ref: wide lane-dense VMEM tiles.
    w = w_ref[0]
    b = b_ref[0]
    # Compute in f32 so the learned scalars are not quantized for bf16/fp16 x;
    # cast only the final result back to the output dtype.
    o_ref[...] = (x_ref[...].astype(jnp.float32) * w + b).astype(o_ref.dtype)


def _pick_width(n):
    # Largest wide, lane-dense last dim (multiple of 128) that divides n exactly.
    for w in (4096, 2048, 1024, 512, 256, 128):
        if n % w == 0:
            return w
    return _LANE  # unreachable on the kernel path (n is a multiple of 128)


def _pick_row_tile(rows, width, itemsize):
    # Sublane packing: 8 rows for f32, 16 for bf16/f16, 32 for int8/fp8.
    sublane = max(8, 32 // itemsize)
    rt = (_BLOCK_BYTES // (width * itemsize)) // sublane * sublane
    rt = max(sublane, rt)
    if rows < 2 * sublane:
        # Too short to split: single full-height block (full-dim block is legal).
        return rows
    # Guarantee >= 2 grid steps so the "parallel" axis can be sharded across
    # v7x's two TensorCores (neutral on single-TC v5e/v6e).
    half = (rows // 2) // sublane * sublane
    return max(sublane, min(rt, half))


def _scale_xla(x, w, b):
    """Plain-XLA fallback with identical semantics (f32 math, cast to x.dtype)."""
    w32 = jnp.asarray(w, jnp.float32).reshape(())
    b32 = jnp.asarray(b, jnp.float32).reshape(())
    return (x.astype(jnp.float32) * w32 + b32).astype(x.dtype)


def scale_forward(x, w, b, *, min_kernel_bytes=_SMALL_INPUT_BYTES):
    """y = w * x + b with scalar w, b broadcast over x (any shape)."""
    orig_shape = x.shape
    orig_dtype = x.dtype
    itemsize = jnp.dtype(orig_dtype).itemsize

    n = 1
    for d in orig_shape:
        n *= int(d)

    # Fast path for tiny tensors: launch overhead dwarfs the transfer time and
    # XLA will fuse the affine into neighbors for free.
    if n * itemsize < min_kernel_bytes:
        return _scale_xla(x, w, b)

    # Ragged (non-128-aligned) flat length: avoid the pad + slice round trip
    # (extra full-tensor HBM passes) and just let XLA do the affine.
    if n % _LANE != 0:
        return _scale_xla(x, w, b)

    flat = x.reshape(-1)
    width = _pick_width(n)
    rows = n // width
    row_tile = _pick_row_tile(rows, width, itemsize)
    x2d = flat.reshape(rows, width)

    # Learned scalars stay f32 in SMEM regardless of x's dtype.
    w_s = jnp.asarray(w, dtype=jnp.float32).reshape(1)
    b_s = jnp.asarray(b, dtype=jnp.float32).reshape(1)

    out2d = pl.pallas_call(
        _scale_kernel,
        out_shape=jax.ShapeDtypeStruct((rows, width), orig_dtype),
        grid_spec=pltpu.PrefetchScalarGridSpec(
            num_scalar_prefetch=0,
            grid=(pl.cdiv(rows, row_tile),),
            in_specs=[
                pl.BlockSpec(memory_space=pltpu.SMEM),   # w (f32 scalar)
                pl.BlockSpec(memory_space=pltpu.SMEM),   # b (f32 scalar)
                pl.BlockSpec((row_tile, width), lambda i: (i, 0)),
            ],
            out_specs=pl.BlockSpec((row_tile, width), lambda i: (i, 0)),
        ),
        # x2d (input index 2) may donate its HBM buffer to the output.
        input_output_aliases={2: 0},
        compiler_params=pltpu.CompilerParams(
            # Single parallel axis: shards across the 2 TensorCores on v7x.
            dimension_semantics=("parallel",),
            vmem_limit_bytes=_VMEM_LIMIT_BYTES,
        ),
    )(w_s, b_s, x2d)

    return out2d.reshape(orig_shape)


if __name__ == "__main__":
    key = jax.random.PRNGKey(0)
    kx, kw, kb = jax.random.split(key, 3)

    # Deterministic stand-ins for torch.rand(1) parameters.
    w = jax.random.uniform(kw, (1,), dtype=jnp.float32)
    b = jax.random.uniform(kb, (1,), dtype=jnp.float32)

    # Tiny NCHW feature map (module's typical example shape): fast path.
    x_small = jax.random.normal(kx, (2, 4, 16, 16), dtype=jnp.float32)
    y_small = scale_forward(x_small, w, b)
    jax.block_until_ready(y_small)
    assert y_small.shape == x_small.shape and y_small.dtype == x_small.dtype
    assert jnp.allclose(y_small, w[0] * x_small + b[0], atol=1e-6), "mismatch (fast path)"

    # Same tiny input forced through the Pallas kernel (correctness of kernel path).
    y_small_k = scale_forward(x_small, w, b, min_kernel_bytes=0)
    jax.block_until_ready(y_small_k)
    assert jnp.allclose(y_small_k, w[0] * x_small + b[0], atol=1e-6), "mismatch (kernel, tiny)"

    # Larger feature map (2 MiB): Pallas kernel path with >= 2 grid steps.
    x_big = jax.random.normal(kx, (2, 16, 128, 128), dtype=jnp.float32)
    y_big = scale_forward(x_big, w, b)
    jax.block_until_ready(y_big)
    assert y_big.shape == x_big.shape and y_big.dtype == x_big.dtype
    assert jnp.allclose(y_big, w[0] * x_big + b[0], atol=1e-6), "mismatch (kernel, big)"

    # Ragged (non-128-aligned) flat length: pure-XLA fallback, no pad round trip.
    x_ragged = jax.random.normal(kx, (3, 5, 7, 3), dtype=jnp.float32)
    y_ragged = scale_forward(x_ragged, w, b)
    jax.block_until_ready(y_ragged)
    assert jnp.allclose(y_ragged, w[0] * x_ragged + b[0], atol=1e-6), "mismatch (ragged)"

    # NOTE: the original module's pdb.set_trace() is a debugging artifact and
    # has no runtime semantics; it is intentionally omitted.
    print("KERNEL_OK")
</pallas_src>

<mosaic_0001>
module attributes {stable_mosaic.version = 11 : i64} {
  func.func @_scale_kernel(%arg0: i32, %arg1: memref<1xf32, #tpu.memory_space<smem>>, %arg2: memref<1xf32, #tpu.memory_space<smem>>, %arg3: memref<1x2048xf32, #tpu.memory_space<vmem>>, %arg4: memref<1x2048xf32, #tpu.memory_space<vmem>>) attributes {dimension_semantics = [#tpu.dimension_semantics<parallel>], iteration_bounds = array<i64: 1>, scalar_prefetch = 0 : i64, scratch_operands = 0 : i64, tpu.core_type = #tpu.core_type<tc>, window_params = [{transform_indices = @transform_0, window_bounds = array<i64: 1>}, {transform_indices = @transform_1, window_bounds = array<i64: 1>}, {transform_indices = @transform_2, window_bounds = array<i64: 1, 2048>}, {transform_indices = @transform_3, window_bounds = array<i64: 1, 2048>}]} {
    %c0 = arith.constant 0 : index
    %0 = memref.load %arg1[%c0] : memref<1xf32, #tpu.memory_space<smem>>
    %c0_0 = arith.constant 0 : index
    %1 = memref.load %arg2[%c0_0] : memref<1xf32, #tpu.memory_space<smem>>
    %c0_1 = arith.constant 0 : index
    %c0_2 = arith.constant 0 : index
    %2 = vector.load %arg3[%c0_1, %c0_2] : memref<1x2048xf32, #tpu.memory_space<vmem>>, vector<1x2048xf32>
    %3 = vector.broadcast %0 : f32 to vector<1x2048xf32>
    %4 = arith.mulf %2, %3 : vector<1x2048xf32>
    %5 = vector.broadcast %1 : f32 to vector<1x2048xf32>
    %6 = arith.addf %4, %5 : vector<1x2048xf32>
    %c0_3 = arith.constant 0 : index
    %c0_4 = arith.constant 0 : index
    %7 = vector.load %arg4[%c0_3, %c0_4] : memref<1x2048xf32, #tpu.memory_space<vmem>>, vector<1x2048xf32>
    tpu.vector_store %arg4[%c0_3, %c0_4], %6 {strides = array<i32>} : memref<1x2048xf32, #tpu.memory_space<vmem>>, vector<1x2048xf32>,
    return
  }
  func.func @transform_0(%arg0: i32) -> i32 {
    %c0_i32 = arith.constant 0 : i32
    %c0_i32_0 = arith.constant 0 : i32
    return %c0_i32 : i32
  }
  func.func @transform_1(%arg0: i32) -> i32 {
    %c0_i32 = arith.constant 0 : i32
    %c0_i32_0 = arith.constant 0 : i32
    return %c0_i32 : i32
  }
  func.func @transform_2(%arg0: i32) -> (i32, i32) {
    %c0_i32 = arith.constant 0 : i32
    %c0_i32_0 = arith.constant 0 : i32
    return %arg0, %c0_i32 : i32, i32
  }
  func.func @transform_3(%arg0: i32) -> (i32, i32) {
    %c0_i32 = arith.constant 0 : i32
    %c0_i32_0 = arith.constant 0 : i32
    return %arg0, %c0_i32 : i32, i32
  }
}

</mosaic_0001>

<llo_original>
// kernel: tpu_custom_call.1
$region0: #{tpu_custom_call.1}
  #allocation0 [shape = 'u32[]', space=smem, size = 0x4, offset = 0x4, fixed_abs, tag = 'smem constant byte address 0x4 - core index']
  #allocation1 [shape = 'u32[144,128]{1,0:T(1,128)}', space=vmem, size = 0x12000, scoped, tag = 'internal scratch']
  #allocation2 [shape = 'f32[1]{0:T(128)S(6)}', space=smem, size = 0x200, scoped, tag = 'scoped memory for tpu_custom_call.1']
  #allocation3 [shape = 'f32[1]{0:T(128)S(6)}', space=smem, size = 0x200, scoped, tag = 'scoped memory for tpu_custom_call.1']
  %s0 = inlined_call_operand.<no memory space> [shape: f32[1], index: 0, kind: input, shape index: {}]
  %s1 = inlined_call_operand.<no memory space> [shape: f32[1], index: 1, kind: input, shape index: {}]
  %s2 = inlined_call_operand.hbm [shape: f32[1,2048], index: 2, kind: input, shape index: {}, may-alias: {2,3}]
  %s3 = inlined_call_operand.hbm [shape: f32[1,2048], index: 3, kind: output, shape index: {}, may-alias: {2,3}]
  %s4 = sld [smem:[#allocation0]]
  $region26: #{tpu_custom_call.1} parent=0
    _
  %s6 = ssub.s32 1, %s4
  %s7 = scalar_select 0, %s6, %s4
  %8 = sst [smem:[#allocation2]] %s0
  %9 = sst [smem:[#allocation3]] %s1
  $region1: #{tpu_custom_call.1} parent=0
    #allocation4 [shape = 'u8[8192]{0}', space=vmem, size = 0x2000, scoped, tag = 'input window, operand 2, single buffered']
    #allocation5 [shape = 's32[1]{0}', space=sflag, size = 0x4, scoped, tag = 'scoped memory for tpu_custom_call.1']
    #allocation6 [shape = 's32[1]{0}', space=sflag, size = 0x4, scoped, tag = 'scoped memory for tpu_custom_call.1']
    #allocation7 [shape = 'u8[8192]{0}', space=vmem, size = 0x2000, scoped, tag = 'output window, operand 0, single buffered']
    %10 = vsyncpa [#allocation5], 0
    %11 = vsyncpa [#allocation6], 0
    // Predicated region
    $region2: #{tpu_custom_call.1} parent=1 // pred_check
      _
    $region3: #{tpu_custom_call.1} parent=1 // pred_check_branch
      %13 = sbr.rel (0) target = $region5
    $region4: #{tpu_custom_call.1} parent=1 // pred_region
      _
    $region5: #{tpu_custom_call.1} parent=1 // pred_fallthru
      _
    // Predicated region
    $region6: #{tpu_custom_call.1} parent=1 // pred_check
      _
    $region7: #{tpu_custom_call.1} parent=1 // pred_check_branch
      %15 = sbr.rel (0) target = $region9
    $region8: #{tpu_custom_call.1} parent=1 // pred_region
      _
    $region9: #{tpu_custom_call.1} parent=1 // pred_fallthru
      _
    // Predicated region
    $region10: #{tpu_custom_call.1} parent=1 // pred_check
      _
    $region11: #{tpu_custom_call.1} parent=1 // pred_check_branch
      %17 = sbr.rel (0) target = $region13
    $region12: #{tpu_custom_call.1} parent=1 // pred_region
      %s19 = ssub.s32 256, 256
      %20 = vsyncadd [#allocation5], %s19
      %s22 = sshll.u32 [#allocation4], 4
      %s23 = int_to_ptr.vmem [resolvable:$true] %s22
      %25 = dma.hbm_to_vmem [thread:$0]  %s2, 256, %s23, [#allocation5]
    $region13: #{tpu_custom_call.1} parent=1 // pred_fallthru
      _
    // Predicated region
    $region14: #{tpu_custom_call.1} parent=1 // pred_check
      _
    $region15: #{tpu_custom_call.1} parent=1 // pred_check_branch
      %27 = sbr.rel (0) target = $region17
    $region16: #{tpu_custom_call.1} parent=1 // pred_region
      %28 = dma.done [#allocation5], 256
    $region17: #{tpu_custom_call.1} parent=1 // pred_fallthru
      _
    %s29 = sld [smem:[#allocation2]]
    %s30 = sld [smem:[#allocation3]]
    %v31 = vld [vmem:[#allocation4] sm:$0xff]
    %v32 = vld [vmem:[#allocation4 + $0x8] sm:$0xff]
    %v33 = vstv %s29
    %v34 = vmul.f32 %v31, %v33
    %v35 = vmul.f32 %v32, %v33
    %v36 = vstv %s30
    %v37 = vadd.f32 %v34, %v36
    %v38 = vadd.f32 %v35, %v36
    %39 = vst [vmem:[#allocation7] sm:$0xff] %v37
    %40 = vst [vmem:[#allocation7 + $0x8] sm:$0xff] %v38
    // Predicated region
    $region18: #{tpu_custom_call.1} parent=1 // pred_check
      _
    $region19: #{tpu_custom_call.1} parent=1 // pred_check_branch
      %42 = sbr.rel (0) target = $region21
    $region20: #{tpu_custom_call.1} parent=1 // pred_region
      %s44 = ssub.s32 256, 256
      %45 = vsyncadd [#allocation6], %s44
      %s47 = sshll.u32 [#allocation7], 4
      %s48 = int_to_ptr.vmem [resolvable:$true] %s47
      %50 = dma.vmem_to_hbm [thread:$0]  %s48, 256, %s3, [#allocation6]
    $region21: #{tpu_custom_call.1} parent=1 // pred_fallthru
      _
    // Predicated region
    $region22: #{tpu_custom_call.1} parent=1 // pred_check
      _
    $region23: #{tpu_custom_call.1} parent=1 // pred_check_branch
      %52 = sbr.rel (0) target = $region25
    $region24: #{tpu_custom_call.1} parent=1 // pred_region
      %53 = dma.done [#allocation6], 256
    $region25: #{tpu_custom_call.1} parent=1 // pred_fallthru
      _
    %54 = vsyncpa [#allocation5], 1
    %55 = vsyncpa [#allocation6], 1

</llo_original>
